<compile_context>
chip_gen: v7x
topology: tpu7x:2x2x1
jax: 0.10.0
libtpu: 0.0.40
codegen_flags: <defaults>
</compile_context>

<pallas_src>
import functools
import math

import jax
import jax.numpy as jnp
from jax.experimental import pallas as pl
from jax.experimental.pallas import tpu as pltpu

EPS = 1e-5


def _round_up(a, b):
    return ((a + b - 1) // b) * b


def _linear_embed_kernel(x_ref, g1_ref, b1_ref, w_ref, b_ref, g2_ref, b2_ref,
                         o_ref, xn_ref, y_ref, *, in_dim, out_dim, out_pad, col_tile):
    j = pl.program_id(1)

    # ---- Pre-LayerNorm over in_dim, computed once per row tile (j == 0) ----
    @pl.when(j == 0)
    def _ln_in():
        x = x_ref[...].astype(jnp.float32)
        inv_in = 1.0 / in_dim
        mu = jnp.sum(x, axis=-1, keepdims=True) * inv_in
        d = x - mu
        var = jnp.sum(d * d, axis=-1, keepdims=True) * inv_in
        xn = d * jax.lax.rsqrt(var + EPS) * g1_ref[...] + b1_ref[...]
        xn_ref[...] = xn.astype(jnp.bfloat16)   # MXU-native operand, cached across j

    # ---- Projection for this weight column block: bf16 x bf16 -> f32 acc ----
    yb = jnp.dot(xn_ref[...], w_ref[...], preferred_element_type=jnp.float32) + b_ref[...]
    start = pl.multiple_of(j * col_tile, 128)
    y_ref[:, pl.ds(start, col_tile)] = yb

    # ---- Post-LayerNorm over the TRUE out_dim + store, on the last column block ----
    @pl.when(j == pl.num_programs(1) - 1)
    def _ln_out():
        y = y_ref[...]
        inv_out = 1.0 / out_dim
        # Padded output columns are exactly zero (zero weight cols / bias), so the
        # plain sum is the true sum; the mean-subtracted sum of squares gets an
        # analytic correction of pad_cols * mu^2 for those columns.
        mu = jnp.sum(y, axis=-1, keepdims=True) * inv_out
        d = y - mu
        ss = jnp.sum(d * d, axis=-1, keepdims=True)
        pad_cols = out_pad - out_dim
        if pad_cols:
            ss = ss - pad_cols * (mu * mu)
        var = jnp.maximum(ss * inv_out, 0.0)
        yn = d * jax.lax.rsqrt(var + EPS) * g2_ref[...] + b2_ref[...]
        # Dropout: identity at inference.
        # TODO(synk): training-mode dropout would use pltpu.prng_seed / prng_random_bits.
        o_ref[...] = yn.astype(o_ref.dtype)


def prepare_linear_embed_params(w, bias, gamma1, beta1, gamma2, beta2):
    """One-time (init-time) parameter prep: transpose + bf16-cast the weight and
    pad the output-feature dim up to a 128-lane multiple.  Hoisting this out of
    the forward path avoids an extra HBM read+write of the weight per call.

    w: [out_dim, in_dim] (PyTorch nn.Linear layout).
    Returns ((w_t_pad, gamma1, beta1, bias_pad, gamma2_pad, beta2_pad), out_dim).
    """
    out_dim, in_dim = w.shape
    out_pad = _round_up(out_dim, 128)
    pad = out_pad - out_dim

    w_t = jnp.asarray(w).T.astype(jnp.bfloat16)            # [in_dim, out_dim]
    w_t = jnp.pad(w_t, ((0, 0), (0, pad)))

    g1 = jnp.asarray(gamma1, jnp.float32).reshape(1, in_dim)
    b1 = jnp.asarray(beta1, jnp.float32).reshape(1, in_dim)
    b = jnp.pad(jnp.asarray(bias, jnp.float32).reshape(1, out_dim), ((0, 0), (0, pad)))
    g2 = jnp.pad(jnp.asarray(gamma2, jnp.float32).reshape(1, out_dim), ((0, 0), (0, pad)))
    b2 = jnp.pad(jnp.asarray(beta2, jnp.float32).reshape(1, out_dim), ((0, 0), (0, pad)))
    return (w_t, g1, b1, b, g2, b2), out_dim


def _col_tile_candidates(out_pad):
    m = out_pad // 128
    return [out_pad // nj for nj in range(1, m + 1) if m % nj == 0]   # descending


@functools.partial(jax.jit,
                   static_argnames=("out_dim", "row_tile", "col_tile", "out_dtype"))
def linear_embed(x, w_t, gamma1, beta1, bias, gamma2, beta2, *, out_dim,
                 row_tile=512, col_tile=None, out_dtype=None):
    """x: [..., in_dim] -> [..., out_dim].  Params from prepare_linear_embed_params."""
    *lead, in_dim = x.shape
    out_pad = w_t.shape[1]
    N = math.prod(lead) if lead else 1
    out_dtype = x.dtype if out_dtype is None else jnp.dtype(out_dtype)
    x2 = x.reshape(N, in_dim)

    # ---- Generation-aware VMEM budget (v7x: 64 MiB/TC; v5e/v6e: 128 MiB). ----
    try:
        vmem_cap = pltpu.get_tpu_info().vmem_capacity_bytes
    except Exception:  # fall back to the smallest per-TC VMEM across generations
        vmem_cap = 64 << 20
    budget = int(0.75 * vmem_cap)

    x_bytes = x.dtype.itemsize
    o_bytes = jnp.dtype(out_dtype).itemsize

    def vmem_est(rt, ct):
        nj_ = out_pad // ct
        w_bufs = 1 if nj_ == 1 else 2
        return (2 * rt * in_dim * x_bytes              # x tiles (double-buffered)
                + 2 * rt * out_pad * o_bytes           # output tiles (double-buffered)
                + w_bufs * in_dim * ct * 2             # bf16 weight blocks
                + w_bufs * ct * 4                      # bias blocks
                + (2 * in_dim + 2 * out_pad) * 4       # gamma/beta (resident, 1x)
                + rt * in_dim * 2                      # xn scratch (bf16)
                + rt * out_pad * 4                     # y scratch (f32)
                + rt * (2 * in_dim + 2 * out_pad + ct) * 4)   # kernel temporaries

    # Row tile: multiple of 8, never bigger than the (rounded) problem.
    rt = min(int(row_tile), _round_up(max(N, 1), 8))
    rt = max(8, (rt // 8) * 8)

    # Weight column tile: largest 128-multiple dividing out_pad that fits the
    # budget; shrink the row tile if even 128-wide columns do not fit.
    ct = col_tile
    if ct is None:
        while True:
            ct = next((c for c in _col_tile_candidates(out_pad)
                       if vmem_est(rt, c) <= budget), None)
            if ct is not None or rt <= 64:
                ct = 128 if ct is None else ct
                break
            rt = max(64, ((rt // 2) // 8) * 8)
    assert ct % 128 == 0 and out_pad % ct == 0, "col_tile must be a 128-multiple dividing out_pad"
    nj = out_pad // ct
    ni = pl.cdiv(N, rt)

    vmem_limit = min(max(int(1.25 * vmem_est(rt, ct)) + (2 << 20), 32 << 20), budget)

    def spec(shape, index_map, buffers=None):
        if buffers is None:
            return pl.BlockSpec(shape, index_map)
        return pl.BlockSpec(shape, index_map, pipeline_mode=pl.Buffered(buffers))

    # Resident single-buffered weight when it fits (nj == 1); streamed (default
    # double-buffered) column blocks otherwise.
    w_buffers = 1 if nj == 1 else None

    kern = functools.partial(_linear_embed_kernel, in_dim=in_dim, out_dim=out_dim,
                             out_pad=out_pad, col_tile=ct)

    out = pl.pallas_call(
        kern,
        out_shape=jax.ShapeDtypeStruct((N, out_pad), out_dtype),
        grid_spec=pltpu.PrefetchScalarGridSpec(
            num_scalar_prefetch=0,
            grid=(ni, nj),
            in_specs=[
                spec((rt, in_dim), lambda i, j: (i, 0)),             # x rows
                spec((1, in_dim), lambda i, j: (0, 0), 1),           # gamma1
                spec((1, in_dim), lambda i, j: (0, 0), 1),           # beta1
                spec((in_dim, ct), lambda i, j: (0, j), w_buffers),  # W^T column block
                spec((1, ct), lambda i, j: (0, j), w_buffers),       # bias column block
                spec((1, out_pad), lambda i, j: (0, 0), 1),          # gamma2 (full row)
                spec((1, out_pad), lambda i, j: (0, 0), 1),          # beta2 (full row)
            ],
            out_specs=pl.BlockSpec((rt, out_pad), lambda i, j: (i, 0)),
            scratch_shapes=[
                pltpu.VMEM((rt, in_dim), jnp.bfloat16),   # cached LN1 output
                pltpu.VMEM((rt, out_pad), jnp.float32),   # full-row y accumulator
            ],
        ),
        compiler_params=pltpu.CompilerParams(
            dimension_semantics=("parallel", "arbitrary"),
            vmem_limit_bytes=vmem_limit,
        ),
    )(x2, gamma1, beta1, w_t, bias, gamma2, beta2)

    if out_pad != out_dim:
        # TODO(synk): consumers that tolerate feature padding can skip this slice
        # (one extra HBM pass) and take the lane-dense (N, out_pad) buffer directly.
        out = out[:, :out_dim]
    return out.reshape(*lead, out_dim)


def _reference(x, w, bias, gamma1, beta1, gamma2, beta2):
    """Pure-f32 reference matching torch: LN -> Linear -> LN -> Dropout(eval)."""
    xf = x.astype(jnp.float32)
    mu = jnp.mean(xf, -1, keepdims=True)
    var = jnp.mean(jnp.square(xf - mu), -1, keepdims=True)
    xn = (xf - mu) * jax.lax.rsqrt(var + EPS) * gamma1 + beta1
    y = xn @ w.T.astype(jnp.float32) + bias
    mu2 = jnp.mean(y, -1, keepdims=True)
    var2 = jnp.mean(jnp.square(y - mu2), -1, keepdims=True)
    return (y - mu2) * jax.lax.rsqrt(var2 + EPS) * gamma2 + beta2


def _run_case(key, B, S, in_dim, out_dim, **kwargs):
    kx, kw, kb, kg1, kb1, kg2, kb2 = jax.random.split(key, 7)
    x = jax.random.normal(kx, (B, S, in_dim), jnp.float32)
    # PyTorch-like init: Linear uniform(+-1/sqrt(in_dim)); non-trivial LN affine.
    bound = 1.0 / math.sqrt(in_dim)
    w = jax.random.uniform(kw, (out_dim, in_dim), jnp.float32, -bound, bound)
    bias = jax.random.uniform(kb, (out_dim,), jnp.float32, -bound, bound)
    gamma1 = 1.0 + 0.1 * jax.random.normal(kg1, (in_dim,), jnp.float32)
    beta1 = 0.1 * jax.random.normal(kb1, (in_dim,), jnp.float32)
    gamma2 = 1.0 + 0.1 * jax.random.normal(kg2, (out_dim,), jnp.float32)
    beta2 = 0.1 * jax.random.normal(kb2, (out_dim,), jnp.float32)

    params, true_out_dim = prepare_linear_embed_params(w, bias, gamma1, beta1, gamma2, beta2)
    out = linear_embed(x, *params, out_dim=true_out_dim, **kwargs)
    out = jax.block_until_ready(out)

    ref = _reference(x, w, bias, gamma1, beta1, gamma2, beta2)
    assert out.shape == (B, S, out_dim), out.shape
    # bf16 MXU operands -> relaxed tolerance vs the f32 reference (post-LN, O(1) scale).
    err = float(jnp.max(jnp.abs(out.astype(jnp.float32) - ref)))
    assert err < 2e-2, f"mismatch vs reference: max abs err {err}"


if __name__ == "__main__":
    key = jax.random.PRNGKey(0)
    k1, k2 = jax.random.split(key)

    # Small case matching the module defaults: single column tile, padded out_dim.
    _run_case(k1, B=2, S=8, in_dim=32, out_dim=64)

    # Ragged rows (N=300 with row_tile=128) + streamed-weight column split (nj=3)
    # + padded out_dim (320 -> 384): exercises the v7x weight-split path and
    # partial-block masking end to end.
    _run_case(k2, B=3, S=100, in_dim=256, out_dim=320, row_tile=128, col_tile=128)

    print("KERNEL_OK")
</pallas_src>

<mosaic_0001>
module attributes {stable_mosaic.version = 11 : i64} {
  func.func @_linear_embed_kernel(%arg0: i32, %arg1: i32, %arg2: memref<16x32xf32, #tpu.memory_space<vmem>>, %arg3: memref<1x32xf32, #tpu.memory_space<vmem>>, %arg4: memref<1x32xf32, #tpu.memory_space<vmem>>, %arg5: memref<32x128xbf16, #tpu.memory_space<vmem>>, %arg6: memref<1x128xf32, #tpu.memory_space<vmem>>, %arg7: memref<1x128xf32, #tpu.memory_space<vmem>>, %arg8: memref<1x128xf32, #tpu.memory_space<vmem>>, %arg9: memref<16x128xf32, #tpu.memory_space<vmem>>, %arg10: memref<16x32xbf16, #tpu.memory_space<vmem>>, %arg11: memref<16x128xf32, #tpu.memory_space<vmem>>) attributes {dimension_semantics = [#tpu.dimension_semantics<parallel>, #tpu.dimension_semantics<arbitrary>], iteration_bounds = array<i64: 1, 1>, scalar_prefetch = 0 : i64, scratch_operands = 2 : i64, tpu.core_type = #tpu.core_type<tc>, window_params = [{transform_indices = @transform_0, window_bounds = array<i64: 16, 32>}, {pipeline_mode = #tpu.pipeline_mode<synchronous>, transform_indices = @transform_1, window_bounds = array<i64: 1, 32>}, {pipeline_mode = #tpu.pipeline_mode<synchronous>, transform_indices = @transform_2, window_bounds = array<i64: 1, 32>}, {pipeline_mode = #tpu.pipeline_mode<synchronous>, transform_indices = @transform_3, window_bounds = array<i64: 32, 128>}, {pipeline_mode = #tpu.pipeline_mode<synchronous>, transform_indices = @transform_4, window_bounds = array<i64: 1, 128>}, {pipeline_mode = #tpu.pipeline_mode<synchronous>, transform_indices = @transform_5, window_bounds = array<i64: 1, 128>}, {pipeline_mode = #tpu.pipeline_mode<synchronous>, transform_indices = @transform_6, window_bounds = array<i64: 1, 128>}, {transform_indices = @transform_7, window_bounds = array<i64: 16, 128>}]} {
    %c0_i32 = arith.constant 0 : i32
    %0 = arith.cmpi eq, %arg1, %c0_i32 : i32
    %1 = arith.extui %0 : i1 to i32
    %c0_i32_0 = arith.constant 0 : i32
    %2 = arith.cmpi ne, %1, %c0_i32_0 : i32
    scf.if %2 {
      %c0_9 = arith.constant 0 : index
      %c0_10 = arith.constant 0 : index
      %16 = vector.load %arg2[%c0_9, %c0_10] : memref<16x32xf32, #tpu.memory_space<vmem>>, vector<16x32xf32>
      %cst_11 = arith.constant dense<0.000000e+00> : vector<16xf32>
      %17 = vector.multi_reduction <add>, %16, %cst_11 [1] : vector<16x32xf32> to vector<16xf32>
      %18 = vector.shape_cast %17 : vector<16xf32> to vector<16x1xf32>
      %cst_12 = arith.constant 3.125000e-02 : f32
      %19 = vector.broadcast %cst_12 : f32 to vector<16x1xf32>
      %20 = arith.mulf %18, %19 : vector<16x1xf32>
      %21 = vector.broadcast %20 : vector<16x1xf32> to vector<16x32xf32>
      %22 = arith.subf %16, %21 : vector<16x32xf32>
      %23 = arith.mulf %22, %22 : vector<16x32xf32>
      %cst_13 = arith.constant dense<0.000000e+00> : vector<16xf32>
      %24 = vector.multi_reduction <add>, %23, %cst_13 [1] : vector<16x32xf32> to vector<16xf32>
      %25 = vector.shape_cast %24 : vector<16xf32> to vector<16x1xf32>
      %cst_14 = arith.constant 3.125000e-02 : f32
      %26 = vector.broadcast %cst_14 : f32 to vector<16x1xf32>
      %27 = arith.mulf %25, %26 : vector<16x1xf32>
      %cst_15 = arith.constant 9.99999974E-6 : f32
      %28 = vector.broadcast %cst_15 : f32 to vector<16x1xf32>
      %29 = arith.addf %27, %28 : vector<16x1xf32>
      %30 = math.rsqrt %29 : vector<16x1xf32>
      %31 = vector.broadcast %30 : vector<16x1xf32> to vector<16x32xf32>
      %32 = arith.mulf %22, %31 : vector<16x32xf32>
      %c0_16 = arith.constant 0 : index
      %c0_17 = arith.constant 0 : index
      %33 = vector.load %arg3[%c0_16, %c0_17] : memref<1x32xf32, #tpu.memory_space<vmem>>, vector<1x32xf32>
      %34 = vector.broadcast %33 : vector<1x32xf32> to vector<16x32xf32>
      %35 = arith.mulf %32, %34 : vector<16x32xf32>
      %c0_18 = arith.constant 0 : index
      %c0_19 = arith.constant 0 : index
      %36 = vector.load %arg4[%c0_18, %c0_19] : memref<1x32xf32, #tpu.memory_space<vmem>>, vector<1x32xf32>
      %37 = vector.broadcast %36 : vector<1x32xf32> to vector<16x32xf32>
      %38 = arith.addf %35, %37 : vector<16x32xf32>
      %39 = arith.truncf %38 : vector<16x32xf32> to vector<16x32xbf16>
      %c0_20 = arith.constant 0 : index
      %c0_21 = arith.constant 0 : index
      %40 = vector.load %arg10[%c0_20, %c0_21] : memref<16x32xbf16, #tpu.memory_space<vmem>>, vector<16x32xbf16>
      tpu.vector_store %arg10[%c0_20, %c0_21], %39 {strides = array<i32>} : memref<16x32xbf16, #tpu.memory_space<vmem>>, vector<16x32xbf16>,
    } else {
    }
    %c0 = arith.constant 0 : index
    %c0_1 = arith.constant 0 : index
    %3 = vector.load %arg10[%c0, %c0_1] : memref<16x32xbf16, #tpu.memory_space<vmem>>, vector<16x32xbf16>
    %c0_2 = arith.constant 0 : index
    %c0_3 = arith.constant 0 : index
    %4 = vector.load %arg5[%c0_2, %c0_3] : memref<32x128xbf16, #tpu.memory_space<vmem>>, vector<32x128xbf16>
    %cst = arith.constant dense<0.000000e+00> : vector<16x128xf32>
    %5 = tpu.matmul %3, %4, %cst {dimension_numbers = #tpu.dot_dimension_numbers<[1], [0], [0], [1], [0, 0, 1, 1], [], []>} : vector<16x32xbf16>, vector<32x128xbf16>, vector<16x128xf32> -> vector<16x128xf32>
    %c0_4 = arith.constant 0 : index
    %c0_5 = arith.constant 0 : index
    %6 = vector.load %arg6[%c0_4, %c0_5] : memref<1x128xf32, #tpu.memory_space<vmem>>, vector<1x128xf32>
    %7 = vector.broadcast %6 : vector<1x128xf32> to vector<16x128xf32>
    %8 = arith.addf %5, %7 : vector<16x128xf32>
    %c128_i32 = arith.constant 128 : i32
    %9 = arith.muli %arg1, %c128_i32 : i32
    %10 = tpu.assume_multiple %9, 128 : i32
    %c0_6 = arith.constant 0 : index
    %11 = arith.index_cast %10 : i32 to index
    %12 = vector.load %arg11[%c0_6, %11] : memref<16x128xf32, #tpu.memory_space<vmem>>, vector<16x128xf32>
    tpu.vector_store %arg11[%c0_6, %11], %8 {strides = array<i32>} : memref<16x128xf32, #tpu.memory_space<vmem>>, vector<16x128xf32>,
    %c0_i32_7 = arith.constant 0 : i32
    %13 = arith.cmpi eq, %arg1, %c0_i32_7 : i32
    %14 = arith.extui %13 : i1 to i32
    %c0_i32_8 = arith.constant 0 : i32
    %15 = arith.cmpi ne, %14, %c0_i32_8 : i32
    scf.if %15 {
      %c0_9 = arith.constant 0 : index
      %c0_10 = arith.constant 0 : index
      %16 = vector.load %arg11[%c0_9, %c0_10] : memref<16x128xf32, #tpu.memory_space<vmem>>, vector<16x128xf32>
      %cst_11 = arith.constant dense<0.000000e+00> : vector<16xf32>
      %17 = vector.multi_reduction <add>, %16, %cst_11 [1] : vector<16x128xf32> to vector<16xf32>
      %18 = vector.shape_cast %17 : vector<16xf32> to vector<16x1xf32>
      %cst_12 = arith.constant 1.562500e-02 : f32
      %19 = vector.broadcast %cst_12 : f32 to vector<16x1xf32>
      %20 = arith.mulf %18, %19 : vector<16x1xf32>
      %21 = vector.broadcast %20 : vector<16x1xf32> to vector<16x128xf32>
      %22 = arith.subf %16, %21 : vector<16x128xf32>
      %23 = arith.mulf %22, %22 : vector<16x128xf32>
      %cst_13 = arith.constant dense<0.000000e+00> : vector<16xf32>
      %24 = vector.multi_reduction <add>, %23, %cst_13 [1] : vector<16x128xf32> to vector<16xf32>
      %25 = vector.shape_cast %24 : vector<16xf32> to vector<16x1xf32>
      %26 = arith.mulf %20, %20 : vector<16x1xf32>
      %cst_14 = arith.constant 6.400000e+01 : f32
      %27 = vector.broadcast %cst_14 : f32 to vector<16x1xf32>
      %28 = arith.mulf %27, %26 : vector<16x1xf32>
      %29 = arith.subf %25, %28 : vector<16x1xf32>
      %cst_15 = arith.constant 1.562500e-02 : f32
      %30 = vector.broadcast %cst_15 : f32 to vector<16x1xf32>
      %31 = arith.mulf %29, %30 : vector<16x1xf32>
      %cst_16 = arith.constant 0.000000e+00 : f32
      %32 = vector.broadcast %cst_16 : f32 to vector<16x1xf32>
      %33 = arith.maximumf %31, %32 : vector<16x1xf32>
      %cst_17 = arith.constant 9.99999974E-6 : f32
      %34 = vector.broadcast %cst_17 : f32 to vector<16x1xf32>
      %35 = arith.addf %33, %34 : vector<16x1xf32>
      %36 = math.rsqrt %35 : vector<16x1xf32>
      %37 = vector.broadcast %36 : vector<16x1xf32> to vector<16x128xf32>
      %38 = arith.mulf %22, %37 : vector<16x128xf32>
      %c0_18 = arith.constant 0 : index
      %c0_19 = arith.constant 0 : index
      %39 = vector.load %arg7[%c0_18, %c0_19] : memref<1x128xf32, #tpu.memory_space<vmem>>, vector<1x128xf32>
      %40 = vector.broadcast %39 : vector<1x128xf32> to vector<16x128xf32>
      %41 = arith.mulf %38, %40 : vector<16x128xf32>
      %c0_20 = arith.constant 0 : index
      %c0_21 = arith.constant 0 : index
      %42 = vector.load %arg8[%c0_20, %c0_21] : memref<1x128xf32, #tpu.memory_space<vmem>>, vector<1x128xf32>
      %43 = vector.broadcast %42 : vector<1x128xf32> to vector<16x128xf32>
      %44 = arith.addf %41, %43 : vector<16x128xf32>
      %c0_22 = arith.constant 0 : index
      %c0_23 = arith.constant 0 : index
      %45 = vector.load %arg9[%c0_22, %c0_23] : memref<16x128xf32, #tpu.memory_space<vmem>>, vector<16x128xf32>
      tpu.vector_store %arg9[%c0_22, %c0_23], %44 {strides = array<i32>} : memref<16x128xf32, #tpu.memory_space<vmem>>, vector<16x128xf32>,
    } else {
    }
    return
  }
  func.func @transform_0(%arg0: i32, %arg1: i32) -> (i32, i32) {
    %c0_i32 = arith.constant 0 : i32
    %c0_i32_0 = arith.constant 0 : i32
    return %arg0, %c0_i32 : i32, i32
  }
  func.func @transform_1(%arg0: i32, %arg1: i32) -> (i32, i32) {
    %c0_i32 = arith.constant 0 : i32
    %c0_i32_0 = arith.constant 0 : i32
    %c0_i32_1 = arith.constant 0 : i32
    return %c0_i32, %c0_i32_0 : i32, i32
  }
  func.func @transform_2(%arg0: i32, %arg1: i32) -> (i32, i32) {
    %c0_i32 = arith.constant 0 : i32
    %c0_i32_0 = arith.constant 0 : i32
    %c0_i32_1 = arith.constant 0 : i32
    return %c0_i32, %c0_i32_0 : i32, i32
  }
  func.func @transform_3(%arg0: i32, %arg1: i32) -> (i32, i32) {
    %c0_i32 = arith.constant 0 : i32
    %c0_i32_0 = arith.constant 0 : i32
    return %c0_i32, %arg1 : i32, i32
  }
  func.func @transform_4(%arg0: i32, %arg1: i32) -> (i32, i32) {
    %c0_i32 = arith.constant 0 : i32
    %c0_i32_0 = arith.constant 0 : i32
    return %c0_i32, %arg1 : i32, i32
  }
  func.func @transform_5(%arg0: i32, %arg1: i32) -> (i32, i32) {
    %c0_i32 = arith.constant 0 : i32
    %c0_i32_0 = arith.constant 0 : i32
    %c0_i32_1 = arith.constant 0 : i32
    return %c0_i32, %c0_i32_0 : i32, i32
  }
  func.func @transform_6(%arg0: i32, %arg1: i32) -> (i32, i32) {
    %c0_i32 = arith.constant 0 : i32
    %c0_i32_0 = arith.constant 0 : i32
    %c0_i32_1 = arith.constant 0 : i32
    return %c0_i32, %c0_i32_0 : i32, i32
  }
  func.func @transform_7(%arg0: i32, %arg1: i32) -> (i32, i32) {
    %c0_i32 = arith.constant 0 : i32
    %c0_i32_0 = arith.constant 0 : i32
    return %arg0, %c0_i32 : i32, i32
  }
}

</mosaic_0001>

<llo_original>
// kernel: linear_embed.1
$region0: #{linear_embed.1}
  #allocation0 [shape = 'u32[]', space=smem, size = 0x4, offset = 0x4, fixed_abs, tag = 'smem constant byte address 0x4 - core index']
  #allocation1 [shape = 'u32[144,128]{1,0:T(1,128)}', space=vmem, size = 0x12000, scoped, tag = 'internal scratch']
  #allocation2 [shape = 'bf16[16,32]{1,0:T(16,128)(2,1)}', space=vmem, size = 0x1000, scoped, tag = 'scratch operand']
  #allocation3 [shape = 'f32[16,128]{1,0:T(8,128)}', space=vmem, size = 0x2000, scoped, tag = 'scratch operand']
  %s0 = inlined_call_operand.hbm [shape: f32[16,32], index: 0, kind: input, shape index: {}]
  %s1 = inlined_call_operand.vmem [shape: f32[1,32], index: 1, kind: input, shape index: {}]
  %s2 = inlined_call_operand.vmem [shape: f32[1,32], index: 2, kind: input, shape index: {}]
  %s3 = inlined_call_operand.hbm [shape: bf16[32,128], index: 3, kind: input, shape index: {}]
  %s4 = inlined_call_operand.vmem [shape: f32[1,128], index: 4, kind: input, shape index: {}]
  %s5 = inlined_call_operand.vmem [shape: f32[1,128], index: 5, kind: input, shape index: {}]
  %s6 = inlined_call_operand.vmem [shape: f32[1,128], index: 6, kind: input, shape index: {}]
  %s7 = inlined_call_operand.vmem [shape: f32[16,128], index: 7, kind: output, shape index: {}]
  %s8 = sld [smem:[#allocation0]]
  $region54: #{linear_embed.1} parent=0
    _
  %s10 = ssub.s32 1, %s8
  %s11 = scalar_select 0, %s10, %s8
  $region1: #{linear_embed.1} parent=0
    #allocation4 [shape = 'u8[8192]{0}', space=vmem, size = 0x2000, scoped, tag = 'input window, operand 0, single buffered']
    #allocation5 [shape = 's32[1]{0}', space=sflag, size = 0x4, scoped, tag = 'scoped memory for linear_embed.1']
    #allocation6 [shape = 'u8[8192]{0}', space=vmem, size = 0x2000, scoped, tag = 'input window, operand 3, single buffered']
    #allocation7 [shape = 's32[1]{0}', space=sflag, size = 0x4, scoped, tag = 'scoped memory for linear_embed.1']
    %12 = vsyncpa [#allocation5], 0
    %13 = vsyncpa [#allocation7], 0
    // Predicated region
    $region2: #{linear_embed.1} parent=1 // pred_check
      _
    $region3: #{linear_embed.1} parent=1 // pred_check_branch
      %15 = sbr.rel (0) target = $region5
    $region4: #{linear_embed.1} parent=1 // pred_region
      %s17 = ssub.s32 256, 256
      %18 = vsyncadd [#allocation5], %s17
      %s19 = sshll.u32 [#allocation4], 4
      %s20 = int_to_ptr.vmem [resolvable:$true] %s19
      %25 = dma.hbm_to_vmem [thread:$0]  %s0, 256, %s20, [#allocation5], 128, 128, 8
    $region5: #{linear_embed.1} parent=1 // pred_fallthru
      _
    // Predicated region
    $region6: #{linear_embed.1} parent=1 // pred_check
      _
    $region7: #{linear_embed.1} parent=1 // pred_check_branch
      %27 = sbr.rel (0) target = $region9
    $region8: #{linear_embed.1} parent=1 // pred_region
      _
    $region9: #{linear_embed.1} parent=1 // pred_fallthru
      _
    // Predicated region
    $region10: #{linear_embed.1} parent=1 // pred_check
      _
    $region11: #{linear_embed.1} parent=1 // pred_check_branch
      %29 = sbr.rel (0) target = $region13
    $region12: #{linear_embed.1} parent=1 // pred_region
      _
    $region13: #{linear_embed.1} parent=1 // pred_fallthru
      _
    // Predicated region
    $region14: #{linear_embed.1} parent=1 // pred_check
      _
    $region15: #{linear_embed.1} parent=1 // pred_check_branch
      %31 = sbr.rel (0) target = $region17
    $region16: #{linear_embed.1} parent=1 // pred_region
      %s33 = ssub.s32 256, 256
      %34 = vsyncadd [#allocation7], %s33
      %s35 = sshll.u32 [#allocation6], 4
      %s36 = int_to_ptr.vmem [resolvable:$true] %s35
      %41 = dma.hbm_to_vmem [thread:$0]  %s3, 256, %s36, [#allocation7], 64, 64, 4
    $region17: #{linear_embed.1} parent=1 // pred_fallthru
      _
    // Predicated region
    $region18: #{linear_embed.1} parent=1 // pred_check
      _
    $region19: #{linear_embed.1} parent=1 // pred_check_branch
      %43 = sbr.rel (0) target = $region21
    $region20: #{linear_embed.1} parent=1 // pred_region
      _
    $region21: #{linear_embed.1} parent=1 // pred_fallthru
      _
    // Predicated region
    $region22: #{linear_embed.1} parent=1 // pred_check
      _
    $region23: #{linear_embed.1} parent=1 // pred_check_branch
      %45 = sbr.rel (0) target = $region25
    $region24: #{linear_embed.1} parent=1 // pred_region
      _
    $region25: #{linear_embed.1} parent=1 // pred_fallthru
      _
    // Predicated region
    $region26: #{linear_embed.1} parent=1 // pred_check
      _
    $region27: #{linear_embed.1} parent=1 // pred_check_branch
      %47 = sbr.rel (0) target = $region29
    $region28: #{linear_embed.1} parent=1 // pred_region
      _
    $region29: #{linear_embed.1} parent=1 // pred_fallthru
      _
    // Predicated region
    $region30: #{linear_embed.1} parent=1 // pred_check
      _
    $region31: #{linear_embed.1} parent=1 // pred_check_branch
      %49 = sbr.rel (0) target = $region33
    $region32: #{linear_embed.1} parent=1 // pred_region
      %50 = dma.done [#allocation5], 256
    $region33: #{linear_embed.1} parent=1 // pred_fallthru
      _
    // Predicated region
    $region34: #{linear_embed.1} parent=1 // pred_check
      _
    $region35: #{linear_embed.1} parent=1 // pred_check_branch
      %52 = sbr.rel (0) target = $region37
    $region36: #{linear_embed.1} parent=1 // pred_region
      %53 = dma.done [#allocation7], 256
    $region37: #{linear_embed.1} parent=1 // pred_fallthru
      _
    %p55 = scmp.eq.s32.totalorder 0, 0
    // Predicated region
    $region38: #{linear_embed.1} parent=1 // pred_check
      %p56 = pneg %p55
    $region39: #{linear_embed.1} parent=1 // pred_check_branch
      %58 = sbr.rel (%p56) target = $region41
    $region40: #{linear_embed.1} parent=1 // pred_region
      %v59 = vld [vmem:[#allocation4] sm:$0xff]
      %v60 = vld [vmem:[#allocation4 + $0x8] sm:$0xff]
      %vm61 = vcmask 261120
      %v62 = vsel %vm61, %v59, 0.0
      %63 = vadd.xlane.f32.xlu0 %v62
      %v64 = vpop.xlane.xlu0 %63
      %v65 = vsel %vm61, %v60, 0.0
      %66 = vadd.xlane.f32.xlu0 %v65
      %v67 = vpop.xlane.xlu0 %66
      %v68 = vmul.f32 %v64, 0.03125
      %v69 = vmul.f32 %v67, 0.03125
      %v70 = vsub.f32 %v59, %v68
      %v71 = vsub.f32 %v60, %v69
      %v72 = vmul.f32 %v70, %v70
      %v73 = vmul.f32 %v71, %v71
      %v74 = vsel %vm61, %v72, 0.0
      %75 = vadd.xlane.f32.xlu0 %v74
      %v76 = vpop.xlane.xlu0 %75
      %v77 = vsel %vm61, %v73, 0.0
      %78 = vadd.xlane.f32.xlu0 %v77
      %v79 = vpop.xlane.xlu0 %78
      %v80 = vmul.f32 %v76, 0.03125
      %v81 = vmul.f32 %v79, 0.03125
      %v82 = vadd.f32 %v80, 1e-05
      %v83 = vadd.f32 %v81, 1e-05
      %v84 = vrsqrt.pop %v82
      %v85 = vrsqrt.pop %v83
      %v86 = vmul.f32 %v70, %v84
      %v87 = vmul.f32 %v71, %v85
      %v88 = vld [vmem:[%s1] sm:$0x1]
      %v90 = vlaneseq
      %v91 = vshrl.u32 %v90, 7
      %v92 = vsub.s32 0, %v91
      %v93 = vrot.slane %v88, %v92
      %v95 = vmul.f32 %v86, %v93
      %v96 = vmul.f32 %v87, %v93
      %v97 = vld [vmem:[%s2] sm:$0x1]
      %v99 = vlaneseq
      %v100 = vshrl.u32 %v99, 7
      %v101 = vsub.s32 0, %v100
      %v102 = vrot.slane %v97, %v101
      %v104 = vadd.f32 %v95, %v102
      %v105 = vadd.f32 %v96, %v102
      %v106 = vpack.c.bf16 %v105, %v104
      %107 = vst.msk [vmem:[#allocation2] sm:$0xff] %vm61, %v106
    $region41: #{linear_embed.1} parent=1 // pred_fallthru
      _
    %v108 = vld [vmem:[#allocation2] sm:$0xff]
    %v109 = vld [vmem:[#allocation6] sm:$0xf]
    %v110 = vld [vmem:[#allocation6 + $0x4] sm:$0xf]
    %v111 = vld [vmem:[#allocation6 + $0x8] sm:$0xf]
    %v112 = vld [vmem:[#allocation6 + $0xc] sm:$0xf]
    %v113 = vld [vmem:[%s4] sm:$0x1]
    %v115 = vlaneseq
    %v116 = vshrl.u32 %v115, 7
    %v117 = vsub.s32 0, %v116
    %v118 = vrot.slane %v113, %v117
    %v124 = vunpack.c.l.b16 %v109
    %v125 = vunpack.c.l.b16 %v110
    %v126 = vunpack.c.l.b16 %v111
    %v127 = vunpack.c.l.b16 %v112
    %v128 = vpack.c.b16 %v125, %v124
    %v129 = vpack.c.b16 %v127, %v126
    %vm132 = vcmask 261120
    %v134 = vsel %vm132, %v108, 0
    %136 = vmatprep.subr.bf16.mxu0 0
    %137 = vmatpush1.bf16.msra.mxu0 %v128
    %138 = vmatprep.subr.bf16.mxu0 0
    %139 = vmatpush1.bf16.msra.mxu0 %v129
    %140 = vmatprep.subr.bf16.mxu0 0
    %141 = vmatpush1.bf16.msra.mxu0 0
    %142 = vmatprep.subr.bf16.mxu0 0
    %143 = vmatpush1.bf16.msra.mxu0 0
    %144 = vmatprep.subr.bf16.mxu0 0
    %145 = vmatpush1.bf16.msra.mxu0 0
    %146 = vmatprep.subr.bf16.mxu0 0
    %147 = vmatpush1.bf16.msra.mxu0 0
    %148 = vmatprep.subr.bf16.mxu0 0
    %149 = vmatpush1.bf16.msra.mxu0 0
    %150 = vmatprep.subr.bf16.mxu0 0
    %151 = vmatpush1.bf16.msra.mxu0 0
    %152 = vmatprep.subr.bf16.mxu0 0
    %153 = vmatpush1.bf16.msra.mxu0 0
    %154 = vmatprep.subr.bf16.mxu0 0
    %155 = vmatpush1.bf16.msra.mxu0 0
    %156 = vmatprep.subr.bf16.mxu0 0
    %157 = vmatpush1.bf16.msra.mxu0 0
    %158 = vmatprep.subr.bf16.mxu0 0
    %159 = vmatpush1.bf16.msra.mxu0 0
    %160 = vmatprep.subr.bf16.mxu0 0
    %161 = vmatpush1.bf16.msra.mxu0 0
    %162 = vmatprep.subr.bf16.mxu0 0
    %163 = vmatpush1.bf16.msra.mxu0 0
    %164 = vmatprep.subr.bf16.mxu0 0
    %165 = vmatpush1.bf16.msra.mxu0 0
    %166 = vmatprep.subr.bf16.mxu0 0
    %167 = vmatpush1.bf16.msra.mxu0 0
    %168 = vmatprep.mubr.bf16.mxu0 0
    %169 = vmatmul.mubr.bf16.gmra.mrb[0].mxu0 %v134
    %v170 = vpop.f32.mrb[0].mxu0
    %v171 = vadd.f32 %v118, %v170
    %v172 = vpop.f32.mrb[0].mxu0
    %v173 = vpop.f32.mrb[0].mxu0
    %v174 = vadd.f32 %v118, %v173
    %v175 = vpop.f32.mrb[0].mxu0
    %176 = vdwg.mxu0
    %s177 = smul.u32 0, 128
    %s178 = sshra.s32 %s177, 7
    %s179 = sand.u32 %s177, 127
    %s180 = scalar_lea.vmem [#allocation3], %s178
    %181 = vst [vmem:[%s180] sm:$0xff] %v171
    %182 = vst [vmem:[%s180 + $0x8] sm:$0xff] %v174
    // Predicated region
    $region42: #{linear_embed.1} parent=1 // pred_check
      %p183 = pneg %p55
    $region43: #{linear_embed.1} parent=1 // pred_check_branch
      %185 = sbr.rel (%p183) target = $region45
    $region44: #{linear_embed.1} parent=1 // pred_region
      %v186 = vld [vmem:[#allocation3] sm:$0xff]
      %v187 = vld [vmem:[#allocation3 + $0x8] sm:$0xff]
      %188 = vadd.xlane.f32.xlu0 %v186
      %v189 = vpop.xlane.xlu0 %188
      %190 = vadd.xlane.f32.xlu0 %v187
      %v191 = vpop.xlane.xlu0 %190
      %v192 = vmul.f32 %v189, 0.015625
      %v193 = vmul.f32 %v191, 0.015625
      %v194 = vsub.f32 %v186, %v192
      %v195 = vsub.f32 %v187, %v193
      %v196 = vmul.f32 %v194, %v194
      %v197 = vmul.f32 %v195, %v195
      %198 = vadd.xlane.f32.xlu0 %v196
      %v199 = vpop.xlane.xlu0 %198
      %200 = vadd.xlane.f32.xlu0 %v197
      %v201 = vpop.xlane.xlu0 %200
      %v202 = vmul.f32 %v192, %v192
      %v203 = vmul.f32 %v193, %v193
      %v204 = vmul.f32 %v202, 64.0
      %v205 = vmul.f32 %v203, 64.0
      %v206 = vsub.f32 %v199, %v204
      %v207 = vsub.f32 %v201, %v205
      %v208 = vmul.f32 %v206, 0.015625
      %v209 = vmul.f32 %v207, 0.015625
      %v210 = vmax.f32 %v208, 0.0
      %v211 = vmax.f32 %v209, 0.0
      %v212 = vadd.f32 %v210, 1e-05
      %v213 = vadd.f32 %v211, 1e-05
      %v214 = vrsqrt.pop %v212
      %v215 = vrsqrt.pop %v213
      %v216 = vmul.f32 %v194, %v214
      %v217 = vmul.f32 %v195, %v215
      %v218 = vld [vmem:[%s5] sm:$0x1]
      %v220 = vlaneseq
      %v221 = vshrl.u32 %v220, 7
      %v222 = vsub.s32 0, %v221
      %v223 = vrot.slane %v218, %v222
      %v225 = vmul.f32 %v216, %v223
      %v226 = vmul.f32 %v217, %v223
      %v227 = vld [vmem:[%s6] sm:$0x1]
      %v229 = vlaneseq
      %v230 = vshrl.u32 %v229, 7
      %v231 = vsub.s32 0, %v230
      %v232 = vrot.slane %v227, %v231
      %v234 = vadd.f32 %v225, %v232
      %v235 = vadd.f32 %v226, %v232
      %236 = vst [vmem:[%s7] sm:$0xff] %v234
      %237 = vst [vmem:[%s7 + $0x8] sm:$0xff] %v235
    $region45: #{linear_embed.1} parent=1 // pred_fallthru
      _
    // Predicated region
    $region46: #{linear_embed.1} parent=1 // pred_check
      _
    $region47: #{linear_embed.1} parent=1 // pred_check_branch
      %239 = sbr.rel (0) target = $region49
    $region48: #{linear_embed.1} parent=1 // pred_region
      _
    $region49: #{linear_embed.1} parent=1 // pred_fallthru
      _
    // Predicated region
    $region50: #{linear_embed.1} parent=1 // pred_check
      _
    $region51: #{linear_embed.1} parent=1 // pred_check_branch
      %241 = sbr.rel (0) target = $region53
    $region52: #{linear_embed.1} parent=1 // pred_region
      _
    $region53: #{linear_embed.1} parent=1 // pred_fallthru
      _
    %242 = vsyncpa [#allocation5], 1
    %243 = vsyncpa [#allocation7], 1

</llo_original>
